<compile_context>
chip_gen: v7x
topology: tpu7x:2x2x1
jax: 0.10.0
libtpu: 0.0.40
codegen_flags: <defaults>
</compile_context>

<pallas_src>
import jax
import jax.numpy as jnp
from jax.experimental import pallas as pl
from jax.experimental.pallas import tpu as pltpu


def _round_up(v, m):
    return ((v + m - 1) // m) * m


def ae_kernel(x_ref,
              w1_ref, b1_ref,     # encoder Linear(D0 -> D1)
              w23_ref, b23_ref,   # fused Linear(D1 -> D2) @ Linear(D2 -> D1)
              w4_ref, b4_ref,     # decoder Linear(D1 -> D0)
              o_ref):
    x = x_ref[...]
    # encoder: Linear -> Sigmoid
    h = jnp.dot(x, w1_ref[...], preferred_element_type=jnp.float32) + b1_ref[...]
    h = jax.nn.sigmoid(h)
    # fused (encoder last Linear) o (decoder first Linear): Linear -> Sigmoid
    d = jnp.dot(h.astype(w23_ref.dtype), w23_ref[...],
                preferred_element_type=jnp.float32) + b23_ref[...]
    d = jax.nn.sigmoid(d)
    # decoder output Linear
    y = jnp.dot(d.astype(w4_ref.dtype), w4_ref[...],
                preferred_element_type=jnp.float32) + b4_ref[...]
    o_ref[...] = y.astype(o_ref.dtype)


def ae_forward(x, params, *, tb=512, compute_dtype=jnp.float32):
    """x: (B, D0) float32.  params: dict of transposed weights / (1, out) biases.

    tb: batch tile (rounded to a multiple of 8).  Keep tb <= ~2048 at f32 so
        double-buffered (tb, D0) in/out tiles stay within the default scoped
        VMEM limit on v5e (16 MiB); v6e/v7x have 32 MiB scoped by default.
    compute_dtype: dtype fed to the MXU (f32 for exactness, bf16 for speed on
        v6e/v7x); accumulation is always f32.
    """
    B, D0 = x.shape
    w1, b1 = params["w1"], params["b1"]
    w2, b2 = params["w2"], params["b2"]
    w3, b3 = params["w3"], params["b3"]
    w4, b4 = params["w4"], params["b4"]
    D1 = w1.shape[1]

    # One-time algebraic fusion of the two linears around the D2 bottleneck
    # (no nonlinearity between them in the PyTorch module):
    #   z = h @ w2 + b2 ; pre = z @ w3 + b3  ==>  pre = h @ (w2 @ w3) + (b2 @ w3 + b3)
    w23 = jnp.dot(w2, w3)                 # (D1, D1), computed in f32
    b23 = jnp.dot(b2, w3) + b3            # (1, D1)

    cd = jnp.dtype(compute_dtype)
    xc = x.astype(cd)
    w1c, w23c, w4c = w1.astype(cd), w23.astype(cd), w4.astype(cd)
    b1f, b23f, b4f = b1.astype(jnp.float32), b23.astype(jnp.float32), b4.astype(jnp.float32)

    # Batch tile: multiple of 8, no larger than the (rounded-up) batch.
    tb = int(tb)
    tb = max(8, min(_round_up(tb, 8), _round_up(B, 8)))
    Bp = _round_up(B, tb)
    if Bp != B:
        xc = jnp.pad(xc, ((0, Bp - B), (0, 0)))
    grid = (Bp // tb,)

    full = lambda shape: pl.BlockSpec(shape, lambda i: (0, 0))

    itemsize = cd.itemsize
    flops = 2 * Bp * (D0 * D1 + D1 * D1 + D1 * D0)
    transcendentals = 2 * Bp * D1  # two sigmoids over (Bp, D1)
    bytes_accessed = (
        Bp * D0 * itemsize                      # x in
        + Bp * D0 * x.dtype.itemsize            # out
        + (w1c.size + w23c.size + w4c.size) * itemsize
        + (b1f.size + b23f.size + b4f.size) * 4
    )

    out = pl.pallas_call(
        ae_kernel,
        out_shape=jax.ShapeDtypeStruct((Bp, D0), x.dtype),
        grid_spec=pltpu.PrefetchScalarGridSpec(
            num_scalar_prefetch=0,
            grid=grid,
            in_specs=[
                pl.BlockSpec((tb, D0), lambda i: (i, 0)),   # x batch tile
                full((D0, D1)), full((1, D1)),              # w1, b1 (grid-invariant)
                full((D1, D1)), full((1, D1)),              # w23, b23
                full((D1, D0)), full((1, D0)),              # w4, b4
            ],
            out_specs=pl.BlockSpec((tb, D0), lambda i: (i, 0)),
        ),
        compiler_params=pltpu.CompilerParams(
            dimension_semantics=("parallel",)),
        cost_estimate=pl.CostEstimate(
            flops=flops,
            transcendentals=transcendentals,
            bytes_accessed=bytes_accessed),
    )(xc, w1c, b1f, w23c, b23f, w4c, b4f)

    return out[:B]


def init_params(key, layers):
    """Deterministic init mimicking PyTorch nn.Linear default (U(-1/sqrt(in), 1/sqrt(in))).
    Weights are stored pre-transposed as (in, out); biases as (1, out)."""
    D0, D1, D2 = layers
    dims = [(D0, D1), (D1, D2), (D2, D1), (D1, D0)]
    params = {}
    keys = jax.random.split(key, 2 * len(dims))
    for idx, (din, dout) in enumerate(dims):
        bound = 1.0 / jnp.sqrt(jnp.float32(din))
        w = jax.random.uniform(keys[2 * idx], (din, dout),
                               minval=-bound, maxval=bound, dtype=jnp.float32)
        b = jax.random.uniform(keys[2 * idx + 1], (1, dout),
                               minval=-bound, maxval=bound, dtype=jnp.float32)
        params[f"w{idx + 1}"] = w
        params[f"b{idx + 1}"] = b
    return params


def ae_reference(x, p):
    """Unfused f32 reference identical to the PyTorch forward."""
    h = jax.nn.sigmoid(x @ p["w1"] + p["b1"])
    z = h @ p["w2"] + p["b2"]
    d = jax.nn.sigmoid(z @ p["w3"] + p["b3"])
    return d @ p["w4"] + p["b4"]


if __name__ == "__main__":
    # Small shapes consistent with AE(layers=(D0, D1, D2)).
    layers = (256, 128, 32)
    batch = 300          # deliberately NOT a multiple of the tile -> exercises padding
    tb = 128             # >=2 grid steps so v7x can use both TensorCores

    key = jax.random.PRNGKey(0)
    kx, kp = jax.random.split(key)
    x = jax.random.normal(kx, (batch, layers[0]), dtype=jnp.float32)
    params = init_params(kp, layers)
    ref = ae_reference(x, params)

    # f32 path (exact up to fusion rounding)
    out_f32 = jax.block_until_ready(ae_forward(x, params, tb=tb))
    assert out_f32.shape == (batch, layers[0])
    assert jnp.allclose(out_f32, ref, atol=1e-4, rtol=1e-4), "f32 mismatch vs reference"

    # bf16 MXU-input path (v6e/v7x fast path), f32 accumulation -> looser tolerance
    out_bf16 = jax.block_until_ready(
        ae_forward(x, params, tb=tb, compute_dtype=jnp.bfloat16))
    assert out_bf16.shape == (batch, layers[0])
    assert jnp.allclose(out_bf16, ref, atol=5e-2, rtol=5e-2), "bf16 mismatch vs reference"

    print("KERNEL_OK")
</pallas_src>

<mosaic_0001>
module attributes {stable_mosaic.version = 11 : i64} {
  func.func @ae_kernel(%arg0: i32, %arg1: memref<128x256xf32, #tpu.memory_space<vmem>>, %arg2: memref<256x128xf32, #tpu.memory_space<vmem>>, %arg3: memref<1x128xf32, #tpu.memory_space<vmem>>, %arg4: memref<128x128xf32, #tpu.memory_space<vmem>>, %arg5: memref<1x128xf32, #tpu.memory_space<vmem>>, %arg6: memref<128x256xf32, #tpu.memory_space<vmem>>, %arg7: memref<1x256xf32, #tpu.memory_space<vmem>>, %arg8: memref<128x256xf32, #tpu.memory_space<vmem>>) attributes {dimension_semantics = [#tpu.dimension_semantics<parallel>], iteration_bounds = array<i64: 3>, scalar_prefetch = 0 : i64, scratch_operands = 0 : i64, tpu.core_type = #tpu.core_type<tc>, window_params = [{transform_indices = @transform_0, window_bounds = array<i64: 128, 256>}, {pipeline_mode = #tpu.pipeline_mode<synchronous>, transform_indices = @transform_1, window_bounds = array<i64: 256, 128>}, {pipeline_mode = #tpu.pipeline_mode<synchronous>, transform_indices = @transform_2, window_bounds = array<i64: 1, 128>}, {pipeline_mode = #tpu.pipeline_mode<synchronous>, transform_indices = @transform_3, window_bounds = array<i64: 128, 128>}, {pipeline_mode = #tpu.pipeline_mode<synchronous>, transform_indices = @transform_4, window_bounds = array<i64: 1, 128>}, {pipeline_mode = #tpu.pipeline_mode<synchronous>, transform_indices = @transform_5, window_bounds = array<i64: 128, 256>}, {pipeline_mode = #tpu.pipeline_mode<synchronous>, transform_indices = @transform_6, window_bounds = array<i64: 1, 256>}, {transform_indices = @transform_7, window_bounds = array<i64: 128, 256>}]} {
    %c0 = arith.constant 0 : index
    %c0_0 = arith.constant 0 : index
    %0 = vector.load %arg1[%c0, %c0_0] : memref<128x256xf32, #tpu.memory_space<vmem>>, vector<128x256xf32>
    %c0_1 = arith.constant 0 : index
    %c0_2 = arith.constant 0 : index
    %1 = vector.load %arg2[%c0_1, %c0_2] : memref<256x128xf32, #tpu.memory_space<vmem>>, vector<256x128xf32>
    %cst = arith.constant dense<0.000000e+00> : vector<128x128xf32>
    %2 = tpu.matmul %0, %1, %cst {dimension_numbers = #tpu.dot_dimension_numbers<[1], [0], [0], [1], [0, 0, 1, 1], [], []>} : vector<128x256xf32>, vector<256x128xf32>, vector<128x128xf32> -> vector<128x128xf32>
    %c0_3 = arith.constant 0 : index
    %c0_4 = arith.constant 0 : index
    %3 = vector.load %arg3[%c0_3, %c0_4] : memref<1x128xf32, #tpu.memory_space<vmem>>, vector<1x128xf32>
    %4 = vector.broadcast %3 : vector<1x128xf32> to vector<128x128xf32>
    %5 = arith.addf %2, %4 : vector<128x128xf32>
    %6 = arith.negf %5 : vector<128x128xf32>
    %7 = math.exp %6 : vector<128x128xf32>
    %cst_5 = arith.constant 1.000000e+00 : f32
    %8 = vector.broadcast %cst_5 : f32 to vector<128x128xf32>
    %9 = arith.addf %8, %7 : vector<128x128xf32>
    %10 = arith.divf %8, %9 : vector<128x128xf32>
    %c0_6 = arith.constant 0 : index
    %c0_7 = arith.constant 0 : index
    %11 = vector.load %arg4[%c0_6, %c0_7] : memref<128x128xf32, #tpu.memory_space<vmem>>, vector<128x128xf32>
    %cst_8 = arith.constant dense<0.000000e+00> : vector<128x128xf32>
    %12 = tpu.matmul %10, %11, %cst_8 {dimension_numbers = #tpu.dot_dimension_numbers<[1], [0], [0], [1], [0, 0, 1, 1], [], []>} : vector<128x128xf32>, vector<128x128xf32>, vector<128x128xf32> -> vector<128x128xf32>
    %c0_9 = arith.constant 0 : index
    %c0_10 = arith.constant 0 : index
    %13 = vector.load %arg5[%c0_9, %c0_10] : memref<1x128xf32, #tpu.memory_space<vmem>>, vector<1x128xf32>
    %14 = vector.broadcast %13 : vector<1x128xf32> to vector<128x128xf32>
    %15 = arith.addf %12, %14 : vector<128x128xf32>
    %16 = arith.negf %15 : vector<128x128xf32>
    %17 = math.exp %16 : vector<128x128xf32>
    %cst_11 = arith.constant 1.000000e+00 : f32
    %18 = vector.broadcast %cst_11 : f32 to vector<128x128xf32>
    %19 = arith.addf %18, %17 : vector<128x128xf32>
    %20 = arith.divf %18, %19 : vector<128x128xf32>
    %c0_12 = arith.constant 0 : index
    %c0_13 = arith.constant 0 : index
    %21 = vector.load %arg6[%c0_12, %c0_13] : memref<128x256xf32, #tpu.memory_space<vmem>>, vector<128x256xf32>
    %cst_14 = arith.constant dense<0.000000e+00> : vector<128x256xf32>
    %22 = tpu.matmul %20, %21, %cst_14 {dimension_numbers = #tpu.dot_dimension_numbers<[1], [0], [0], [1], [0, 0, 1, 1], [], []>} : vector<128x128xf32>, vector<128x256xf32>, vector<128x256xf32> -> vector<128x256xf32>
    %c0_15 = arith.constant 0 : index
    %c0_16 = arith.constant 0 : index
    %23 = vector.load %arg7[%c0_15, %c0_16] : memref<1x256xf32, #tpu.memory_space<vmem>>, vector<1x256xf32>
    %24 = vector.broadcast %23 : vector<1x256xf32> to vector<128x256xf32>
    %25 = arith.addf %22, %24 : vector<128x256xf32>
    %c0_17 = arith.constant 0 : index
    %c0_18 = arith.constant 0 : index
    %26 = vector.load %arg8[%c0_17, %c0_18] : memref<128x256xf32, #tpu.memory_space<vmem>>, vector<128x256xf32>
    tpu.vector_store %arg8[%c0_17, %c0_18], %25 {strides = array<i32>} : memref<128x256xf32, #tpu.memory_space<vmem>>, vector<128x256xf32>,
    return
  }
  func.func @transform_0(%arg0: i32) -> (i32, i32) {
    %c0_i32 = arith.constant 0 : i32
    %c0_i32_0 = arith.constant 0 : i32
    return %arg0, %c0_i32 : i32, i32
  }
  func.func @transform_1(%arg0: i32) -> (i32, i32) {
    %c0_i32 = arith.constant 0 : i32
    %c0_i32_0 = arith.constant 0 : i32
    %c0_i32_1 = arith.constant 0 : i32
    return %c0_i32, %c0_i32_0 : i32, i32
  }
  func.func @transform_2(%arg0: i32) -> (i32, i32) {
    %c0_i32 = arith.constant 0 : i32
    %c0_i32_0 = arith.constant 0 : i32
    %c0_i32_1 = arith.constant 0 : i32
    return %c0_i32, %c0_i32_0 : i32, i32
  }
  func.func @transform_3(%arg0: i32) -> (i32, i32) {
    %c0_i32 = arith.constant 0 : i32
    %c0_i32_0 = arith.constant 0 : i32
    %c0_i32_1 = arith.constant 0 : i32
    return %c0_i32, %c0_i32_0 : i32, i32
  }
  func.func @transform_4(%arg0: i32) -> (i32, i32) {
    %c0_i32 = arith.constant 0 : i32
    %c0_i32_0 = arith.constant 0 : i32
    %c0_i32_1 = arith.constant 0 : i32
    return %c0_i32, %c0_i32_0 : i32, i32
  }
  func.func @transform_5(%arg0: i32) -> (i32, i32) {
    %c0_i32 = arith.constant 0 : i32
    %c0_i32_0 = arith.constant 0 : i32
    %c0_i32_1 = arith.constant 0 : i32
    return %c0_i32, %c0_i32_0 : i32, i32
  }
  func.func @transform_6(%arg0: i32) -> (i32, i32) {
    %c0_i32 = arith.constant 0 : i32
    %c0_i32_0 = arith.constant 0 : i32
    %c0_i32_1 = arith.constant 0 : i32
    return %c0_i32, %c0_i32_0 : i32, i32
  }
  func.func @transform_7(%arg0: i32) -> (i32, i32) {
    %c0_i32 = arith.constant 0 : i32
    %c0_i32_0 = arith.constant 0 : i32
    return %arg0, %c0_i32 : i32, i32
  }
}

</mosaic_0001>

<llo_original>
// kernel: tpu_custom_call.1
$region0: #{tpu_custom_call.1}
  #allocation0 [shape = 'u32[]', space=smem, size = 0x4, offset = 0x4, fixed_abs, tag = 'smem constant byte address 0x4 - core index']
  #allocation1 [shape = 'u32[144,128]{1,0:T(1,128)}', space=vmem, size = 0x12000, scoped, tag = 'internal scratch']
  %s0 = inlined_call_operand.hbm [shape: f32[384,256], index: 0, kind: input, shape index: {}]
  %s1 = inlined_call_operand.hbm [shape: f32[256,128], index: 1, kind: input, shape index: {}]
  %s2 = inlined_call_operand.vmem [shape: f32[1,128], index: 2, kind: input, shape index: {}]
  %s3 = inlined_call_operand.hbm [shape: f32[128,128], index: 3, kind: input, shape index: {}]
  %s4 = inlined_call_operand.vmem [shape: f32[1,128], index: 4, kind: input, shape index: {}]
  %s5 = inlined_call_operand.hbm [shape: f32[128,256], index: 5, kind: input, shape index: {}]
  %s6 = inlined_call_operand.vmem [shape: f32[1,256], index: 6, kind: input, shape index: {}]
  %s7 = inlined_call_operand.hbm [shape: f32[384,256], index: 7, kind: output, shape index: {}]
  %s8 = sld [smem:[#allocation0]]
  $region77: #{tpu_custom_call.1} parent=0
    _
  %s10 = ssub.s32 1, %s8
  %s11 = scalar_select 0, %s10, %s8
  $region1: #{tpu_custom_call.1} parent=0
    #allocation2 [shape = 'u8[262144]{0}', space=vmem, size = 0x40000, scoped, tag = 'input window, operand 0']
    #allocation3 [shape = 's32[2]{0}', space=sflag, size = 0x8, scoped, tag = 'scoped memory for tpu_custom_call.1']
    #allocation4 [shape = 's32[2]{0}', space=sflag, size = 0x8, scoped, tag = 'scoped memory for tpu_custom_call.1']
    #allocation5 [shape = 'u8[131072]{0}', space=vmem, size = 0x20000, scoped, tag = 'input window, operand 1, single buffered']
    #allocation6 [shape = 's32[1]{0}', space=sflag, size = 0x4, scoped, tag = 'scoped memory for tpu_custom_call.1']
    #allocation7 [shape = 'u8[65536]{0}', space=vmem, size = 0x10000, scoped, tag = 'input window, operand 3, single buffered']
    #allocation8 [shape = 'u8[131072]{0}', space=vmem, size = 0x20000, scoped, tag = 'input window, operand 5, single buffered']
    #allocation9 [shape = 's32[1]{0}', space=sflag, size = 0x4, scoped, tag = 'scoped memory for tpu_custom_call.1']
    #allocation10 [shape = 'u8[262144]{0}', space=vmem, size = 0x40000, scoped, tag = 'output window, operand 0']
    %12 = vsyncpa [#allocation3], 0
    %s13 = scalar_lea.sflag [#allocation3], 1
    %14 = vsyncpa %s13, 0
    %15 = vsyncpa [#allocation6], 0
    %16 = vsyncpa [#allocation9], 0
    %17 = vsyncpa [#allocation4], 0
    %s18 = scalar_lea.sflag [#allocation4], 1
    %19 = vsyncpa %s18, 0
    loop: start=0, step=1, limit=5
    $region2: #{tpu_custom_call.1} parent=1 // loop_pre_header
      _
    $region3: #{tpu_custom_call.1} parent=1 // loop_header
      %s21 = sphi 0, %s25
      %p22 = scmp.ge.s32.totalorder %s21, 5
      %s31 = sphi 0, %s33
      %s34 = sphi 0, %s31
      %s35 = sphi 0, %s34
      %s51 = sphi 0, %s35
      %s55 = sphi 0, %s55
      %s57 = sphi 0, %s55
      %s58 = sphi 0, %s57
      %s72 = sphi 0, %s58
      %s76 = sphi 0, %s76
      %s78 = sphi 0, %s76
      %s79 = sphi 0, %s78
      %s93 = sphi 0, %s79
      %s97 = sphi 0, %s97
      %s99 = sphi 0, %s97
      %s100 = sphi 0, %s99
      %s114 = sphi 0, %s100
      %s118 = sphi 0, %s118
      %s120 = sphi 0, %s118
      %s121 = sphi 0, %s120
      %s135 = sphi 0, %s121
      %s139 = sphi 0, %s139
      %s141 = sphi 0, %s139
      %s142 = sphi 0, %s141
      %s156 = sphi 0, %s142
      %s160 = sphi 0, %s160
      %s162 = sphi 0, %s160
      %s163 = sphi 0, %s162
      %s177 = sphi 0, %s163
      %s183 = sphi 0, %s185
      %s186 = sphi 0, %s183
      %s187 = sphi 0, %s186
      %s203 = sphi 0, %s187
    $region4: #{tpu_custom_call.1} parent=1 // loop_header_branch
      %24 = sbr.rel (%p22) target = $region8
    $region5: #{tpu_custom_call.1} parent=1 // loop_body
      %s26 = ssub.s32 %s21, 1
      %s27 = ssub.s32 %s21, 2
      %s28 = sadd.s32 %s21, 1
      %s29 = ssub.s32 %s21, %s28
      %p30 = scmp.eq.s32.totalorder %s29, 0
      %s32 = sadd.s32 %s31, 1
      %s33 = scalar_select %p30, %s31, %s32
      %p36 = pneg %p30
      %p37 = scmp.eq.s32.totalorder %s21, 2
      %p38 = por %p36, %p37
      %p39 = scmp.ne.s32.totalorder %s31, %s34
      %p40 = scmp.eq.s32.totalorder %s21, 0
      %p41 = por %p39, %p40
      %p42 = scmp.ne.s32.totalorder %s31, %s34
      %p43 = scmp.eq.s32.totalorder %s26, 2
      %p44 = por %p42, %p43
      %p45 = scmp.ne.s32.totalorder %s34, %s35
      %p46 = scmp.eq.s32.totalorder %s26, 0
      %p47 = por %p45, %p46
      %p48 = scmp.ne.s32.totalorder %s34, %s35
      %p49 = scmp.eq.s32.totalorder %s27, 2
      %p50 = por %p48, %p49
      %p52 = scmp.ne.s32.totalorder %s35, %s51
      %p53 = scmp.eq.s32.totalorder %s27, 0
      %p54 = por %p52, %p53
      %s56 = sadd.s32 %s55, 1
      %p59 = scmp.eq.s32.totalorder %s21, 2
      %p60 = scmp.ne.s32.totalorder %s55, %s57
      %p61 = scmp.eq.s32.totalorder %s21, 0
      %p62 = por %p60, %p61
      %p63 = scmp.ne.s32.totalorder %s55, %s57
      %p64 = scmp.eq.s32.totalorder %s26, 2
      %p65 = por %p63, %p64
      %p66 = scmp.ne.s32.totalorder %s57, %s58
      %p67 = scmp.eq.s32.totalorder %s26, 0
      %p68 = por %p66, %p67
      %p69 = scmp.ne.s32.totalorder %s57, %s58
      %p70 = scmp.eq.s32.totalorder %s27, 2
      %p71 = por %p69, %p70
      %p73 = scmp.ne.s32.totalorder %s58, %s72
      %p74 = scmp.eq.s32.totalorder %s27, 0
      %p75 = por %p73, %p74
      %s77 = sadd.s32 %s76, 1
      %p80 = scmp.eq.s32.totalorder %s21, 2
      %p81 = scmp.ne.s32.totalorder %s76, %s78
      %p82 = scmp.eq.s32.totalorder %s21, 0
      %p83 = por %p81, %p82
      %p84 = scmp.ne.s32.totalorder %s76, %s78
      %p85 = scmp.eq.s32.totalorder %s26, 2
      %p86 = por %p84, %p85
      %p87 = scmp.ne.s32.totalorder %s78, %s79
      %p88 = scmp.eq.s32.totalorder %s26, 0
      %p89 = por %p87, %p88
      %p90 = scmp.ne.s32.totalorder %s78, %s79
      %p91 = scmp.eq.s32.totalorder %s27, 2
      %p92 = por %p90, %p91
      %p94 = scmp.ne.s32.totalorder %s79, %s93
      %p95 = scmp.eq.s32.totalorder %s27, 0
      %p96 = por %p94, %p95
      %s98 = sadd.s32 %s97, 1
      %p101 = scmp.eq.s32.totalorder %s21, 2
      %p102 = scmp.ne.s32.totalorder %s97, %s99
      %p103 = scmp.eq.s32.totalorder %s21, 0
      %p104 = por %p102, %p103
      %p105 = scmp.ne.s32.totalorder %s97, %s99
      %p106 = scmp.eq.s32.totalorder %s26, 2
      %p107 = por %p105, %p106
      %p108 = scmp.ne.s32.totalorder %s99, %s100
      %p109 = scmp.eq.s32.totalorder %s26, 0
      %p110 = por %p108, %p109
      %p111 = scmp.ne.s32.totalorder %s99, %s100
      %p112 = scmp.eq.s32.totalorder %s27, 2
      %p113 = por %p111, %p112
      %p115 = scmp.ne.s32.totalorder %s100, %s114
      %p116 = scmp.eq.s32.totalorder %s27, 0
      %p117 = por %p115, %p116
      %s119 = sadd.s32 %s118, 1
      %p122 = scmp.eq.s32.totalorder %s21, 2
      %p123 = scmp.ne.s32.totalorder %s118, %s120
      %p124 = scmp.eq.s32.totalorder %s21, 0
      %p125 = por %p123, %p124
      %p126 = scmp.ne.s32.totalorder %s118, %s120
      %p127 = scmp.eq.s32.totalorder %s26, 2
      %p128 = por %p126, %p127
      %p129 = scmp.ne.s32.totalorder %s120, %s121
      %p130 = scmp.eq.s32.totalorder %s26, 0
      %p131 = por %p129, %p130
      %p132 = scmp.ne.s32.totalorder %s120, %s121
      %p133 = scmp.eq.s32.totalorder %s27, 2
      %p134 = por %p132, %p133
      %p136 = scmp.ne.s32.totalorder %s121, %s135
      %p137 = scmp.eq.s32.totalorder %s27, 0
      %p138 = por %p136, %p137
      %s140 = sadd.s32 %s139, 1
      %p143 = scmp.eq.s32.totalorder %s21, 2
      %p144 = scmp.ne.s32.totalorder %s139, %s141
      %p145 = scmp.eq.s32.totalorder %s21, 0
      %p146 = por %p144, %p145
      %p147 = scmp.ne.s32.totalorder %s139, %s141
      %p148 = scmp.eq.s32.totalorder %s26, 2
      %p149 = por %p147, %p148
      %p150 = scmp.ne.s32.totalorder %s141, %s142
      %p151 = scmp.eq.s32.totalorder %s26, 0
      %p152 = por %p150, %p151
      %p153 = scmp.ne.s32.totalorder %s141, %s142
      %p154 = scmp.eq.s32.totalorder %s27, 2
      %p155 = por %p153, %p154
      %p157 = scmp.ne.s32.totalorder %s142, %s156
      %p158 = scmp.eq.s32.totalorder %s27, 0
      %p159 = por %p157, %p158
      %s161 = sadd.s32 %s160, 1
      %p164 = scmp.eq.s32.totalorder %s21, 2
      %p165 = scmp.ne.s32.totalorder %s160, %s162
      %p166 = scmp.eq.s32.totalorder %s21, 0
      %p167 = por %p165, %p166
      %p168 = scmp.ne.s32.totalorder %s160, %s162
      %p169 = scmp.eq.s32.totalorder %s26, 2
      %p170 = por %p168, %p169
      %p171 = scmp.ne.s32.totalorder %s162, %s163
      %p172 = scmp.eq.s32.totalorder %s26, 0
      %p173 = por %p171, %p172
      %p174 = scmp.ne.s32.totalorder %s162, %s163
      %p175 = scmp.eq.s32.totalorder %s27, 2
      %p176 = por %p174, %p175
      %p178 = scmp.ne.s32.totalorder %s163, %s177
      %p179 = scmp.eq.s32.totalorder %s27, 0
      %p180 = por %p178, %p179
      %s181 = ssub.s32 %s21, %s28
      %p182 = scmp.eq.s32.totalorder %s181, 0
      %s184 = sadd.s32 %s183, 1
      %s185 = scalar_select %p182, %s183, %s184
      %p188 = pneg %p182
      %p189 = scmp.eq.s32.totalorder %s21, 2
      %p190 = por %p188, %p189
      %p191 = scmp.ne.s32.totalorder %s183, %s186
      %p192 = scmp.eq.s32.totalorder %s21, 0
      %p193 = por %p191, %p192
      %p194 = scmp.ne.s32.totalorder %s183, %s186
      %p195 = scmp.eq.s32.totalorder %s26, 2
      %p196 = por %p194, %p195
      %p197 = scmp.ne.s32.totalorder %s186, %s187
      %p198 = scmp.eq.s32.totalorder %s26, 0
      %p199 = por %p197, %p198
      %p200 = scmp.ne.s32.totalorder %s186, %s187
      %p201 = scmp.eq.s32.totalorder %s27, 2
      %p202 = por %p200, %p201
      %p204 = scmp.ne.s32.totalorder %s187, %s203
      %p205 = scmp.eq.s32.totalorder %s27, 0
      %p206 = por %p204, %p205
      %p207 = scmp.le.s32.totalorder 1, %s21
      %p208 = scmp.lt.s32.totalorder %s21, 4
      %p209 = pnand %p207, %p208
      %p210 = pneg %p209
      // Predicated region
      $region9: #{tpu_custom_call.1} parent=5 // pred_check
        _
      $region10: #{tpu_custom_call.1} parent=5 // pred_check_branch
        %212 = sbr.rel (%p209) target = $region12
      $region11: #{tpu_custom_call.1} parent=5 // pred_region
        %s213 = ssub.s32 %s21, 1
        // Predicated region
        $region13: #{tpu_custom_call.1} parent=11 // pred_check
          %p214 = pneg %p68
        $region14: #{tpu_custom_call.1} parent=11 // pred_check_branch
          %216 = sbr.rel (%p214) target = $region16
        $region15: #{tpu_custom_call.1} parent=11 // pred_region
          %s218 = ssub.s32 4096, 4096
          %219 = vsyncadd [#allocation6], %s218
          %s220 = sshll.u32 [#allocation5], 4
          %s221 = int_to_ptr.vmem [resolvable:$true] %s220
          %226 = dma.hbm_to_vmem [thread:$0]  %s1, 4096, %s221, [#allocation6], 128, 128, 8
        $region16: #{tpu_custom_call.1} parent=11 // pred_fallthru
          _
        // Predicated region
        $region17: #{tpu_custom_call.1} parent=11 // pred_check
          %p227 = pneg %p89
        $region18: #{tpu_custom_call.1} parent=11 // pred_check_branch
          %229 = sbr.rel (%p227) target = $region20
        $region19: #{tpu_custom_call.1} parent=11 // pred_region
          _
        $region20: #{tpu_custom_call.1} parent=11 // pred_fallthru
          _
        // Predicated region
        $region21: #{tpu_custom_call.1} parent=11 // pred_check
          %p230 = pneg %p110
        $region22: #{tpu_custom_call.1} parent=11 // pred_check_branch
          %232 = sbr.rel (%p230) target = $region24
        $region23: #{tpu_custom_call.1} parent=11 // pred_region
          %s234 = ssub.s32 2048, 2048
          %235 = vsyncadd [#allocation6], %s234
          %s236 = sshll.u32 [#allocation7], 4
          %s237 = int_to_ptr.vmem [resolvable:$true] %s236
          %242 = dma.hbm_to_vmem [thread:$0]  %s3, 2048, %s237, [#allocation6], 128, 128, 8
        $region24: #{tpu_custom_call.1} parent=11 // pred_fallthru
          _
        // Predicated region
        $region25: #{tpu_custom_call.1} parent=11 // pred_check
          %p243 = pneg %p131
        $region26: #{tpu_custom_call.1} parent=11 // pred_check_branch
          %245 = sbr.rel (%p243) target = $region28
        $region27: #{tpu_custom_call.1} parent=11 // pred_region
          _
        $region28: #{tpu_custom_call.1} parent=11 // pred_fallthru
          _
        // Predicated region
        $region29: #{tpu_custom_call.1} parent=11 // pred_check
          %p246 = pneg %p152
        $region30: #{tpu_custom_call.1} parent=11 // pred_check_branch
          %248 = sbr.rel (%p246) target = $region32
        $region31: #{tpu_custom_call.1} parent=11 // pred_region
          %s250 = ssub.s32 4096, 4096
          %251 = vsyncadd [#allocation9], %s250
          %s252 = sshll.u32 [#allocation8], 4
          %s253 = int_to_ptr.vmem [resolvable:$true] %s252
          %258 = dma.hbm_to_vmem [thread:$0]  %s5, 4096, %s253, [#allocation9], 256, 256, 16
        $region32: #{tpu_custom_call.1} parent=11 // pred_fallthru
          _
        // Predicated region
        $region33: #{tpu_custom_call.1} parent=11 // pred_check
          %p259 = pneg %p173
        $region34: #{tpu_custom_call.1} parent=11 // pred_check_branch
          %261 = sbr.rel (%p259) target = $region36
        $region35: #{tpu_custom_call.1} parent=11 // pred_region
          _
        $region36: #{tpu_custom_call.1} parent=11 // pred_fallthru
          _
      $region12: #{tpu_custom_call.1} parent=5 // pred_fallthru
        _
      %p262 = scmp.lt.s32.totalorder %s21, 3
      // Predicated region
      $region37: #{tpu_custom_call.1} parent=5 // pred_check
        %p263 = pneg %p262
      $region38: #{tpu_custom_call.1} parent=5 // pred_check_branch
        %265 = sbr.rel (%p263) target = $region40
      $region39: #{tpu_custom_call.1} parent=5 // pred_region
        // Predicated region
        $region41: #{tpu_custom_call.1} parent=39 // pred_check
          %p266 = pneg %p41
        $region42: #{tpu_custom_call.1} parent=39 // pred_check_branch
          %268 = sbr.rel (%p266) target = $region44
        $region43: #{tpu_custom_call.1} parent=39 // pred_region
          %s269 = sand.u32 %s31, 1
          %s270 = scalar_lea.sflag [#allocation3], %s269
          %s271 = sand.u32 %s31, 1
          %s272 = smul.addr %s271, 256
          %s273 = scalar_lea.vmem [#allocation2], %s272
          %s274 = smul.u32 16, %s21
          %s276 = ssub.s32 4096, 4096
          %277 = vsyncadd %s270, %s276
          %s278 = smul.addr %s274, 2
          %s279 = smul.addr %s278, 128
          %s280 = scalar_lea.hbm %s0, %s279
          %s281 = sshll.u32 %s273, 4
          %s282 = int_to_ptr.vmem [resolvable:$true] %s281
          %287 = dma.hbm_to_vmem [thread:$0]  %s280, 4096, %s282, %s270, 256, 256, 16
        $region44: #{tpu_custom_call.1} parent=39 // pred_fallthru
          _
      $region40: #{tpu_custom_call.1} parent=5 // pred_fallthru
        _
      %p288 = scmp.le.s32.totalorder 1, %s21
      %p289 = scmp.lt.s32.totalorder %s21, 4
      %p290 = pnand %p288, %p289
      %p291 = pneg %p290
      // Predicated region
      $region45: #{tpu_custom_call.1} parent=5 // pred_check
        _
      $region46: #{tpu_custom_call.1} parent=5 // pred_check_branch
        %293 = sbr.rel (%p290) target = $region48
      $region47: #{tpu_custom_call.1} parent=5 // pred_region
        %s294 = ssub.s32 %s21, 1
        %s295 = sand.u32 %s34, 1
        %s296 = scalar_lea.sflag [#allocation3], %s295
        %s297 = sand.u32 %s34, 1
        %s298 = smul.addr %s297, 256
        %s299 = scalar_lea.vmem [#allocation2], %s298
        // Predicated region
        $region49: #{tpu_custom_call.1} parent=47 // pred_check
          %p300 = pneg %p47
        $region50: #{tpu_custom_call.1} parent=47 // pred_check_branch
          %302 = sbr.rel (%p300) target = $region52
        $region51: #{tpu_custom_call.1} parent=47 // pred_region
          %303 = dma.done %s296, 4096
        $region52: #{tpu_custom_call.1} parent=47 // pred_fallthru
          _
        // Predicated region
        $region53: #{tpu_custom_call.1} parent=47 // pred_check
          %p304 = pneg %p68
        $region54: #{tpu_custom_call.1} parent=47 // pred_check_branch
          %306 = sbr.rel (%p304) target = $region56
        $region55: #{tpu_custom_call.1} parent=47 // pred_region
          %307 = dma.done [#allocation6], 4096
        $region56: #{tpu_custom_call.1} parent=47 // pred_fallthru
          _
        // Predicated region
        $region57: #{tpu_custom_call.1} parent=47 // pred_check
          %p308 = pneg %p110
        $region58: #{tpu_custom_call.1} parent=47 // pred_check_branch
          %310 = sbr.rel (%p308) target = $region60
        $region59: #{tpu_custom_call.1} parent=47 // pred_region
          %311 = dma.done [#allocation6], 2048
        $region60: #{tpu_custom_call.1} parent=47 // pred_fallthru
          _
        // Predicated region
        $region61: #{tpu_custom_call.1} parent=47 // pred_check
          %p312 = pneg %p152
        $region62: #{tpu_custom_call.1} parent=47 // pred_check_branch
          %314 = sbr.rel (%p312) target = $region64
        $region63: #{tpu_custom_call.1} parent=47 // pred_region
          %315 = dma.done [#allocation9], 4096
        $region64: #{tpu_custom_call.1} parent=47 // pred_fallthru
          _
        %s316 = sand.u32 %s34, 1
        %s317 = scalar_lea.sflag [#allocation3], %s316
        %s318 = sand.u32 %s34, 1
        %s319 = smul.addr %s318, 256
        %s320 = scalar_lea.vmem [#allocation2], %s319
        %p321 = pneg %p47
        %p322 = pneg %p44
        %p323 = pneg %p68
        %p324 = pneg %p65
        %p325 = pneg %p89
        %p326 = pneg %p86
        %p327 = pneg %p110
        %p328 = pneg %p107
        %p329 = pneg %p131
        %p330 = pneg %p128
        %p331 = pneg %p152
        %p332 = pneg %p149
        %p333 = pneg %p173
        %p334 = pneg %p170
        %p335 = pneg %p199
        %p336 = pneg %p196
        %s337 = sand.u32 %s186, 1
        %s338 = scalar_lea.sflag [#allocation4], %s337
        %s339 = sand.u32 %s186, 1
        %s340 = smul.addr %s339, 256
        %s341 = scalar_lea.vmem [#allocation10], %s340
        %s342 = smul.u32 16, %s26
        %s343 = smul.u32 16, %s26
        %v344 = vld [vmem:[%s299] sm:$0xff]
        %v345 = vld [vmem:[%s299 + $0x8] sm:$0xff]
        %v346 = vld [vmem:[%s299 + $0x10] sm:$0xff]
        %v347 = vld [vmem:[%s299 + $0x18] sm:$0xff]
        %v348 = vld [vmem:[%s299 + $0x20] sm:$0xff]
        %v349 = vld [vmem:[%s299 + $0x28] sm:$0xff]
        %v350 = vld [vmem:[%s299 + $0x30] sm:$0xff]
        %v351 = vld [vmem:[%s299 + $0x38] sm:$0xff]
        %v352 = vld [vmem:[%s299 + $0x40] sm:$0xff]
        %v353 = vld [vmem:[%s299 + $0x48] sm:$0xff]
        %v354 = vld [vmem:[%s299 + $0x50] sm:$0xff]
        %v355 = vld [vmem:[%s299 + $0x58] sm:$0xff]
        %v356 = vld [vmem:[%s299 + $0x60] sm:$0xff]
        %v357 = vld [vmem:[%s299 + $0x68] sm:$0xff]
        %v358 = vld [vmem:[%s299 + $0x70] sm:$0xff]
        %v359 = vld [vmem:[%s299 + $0x78] sm:$0xff]
        %v360 = vld [vmem:[%s299 + $0x80] sm:$0xff]
        %v361 = vld [vmem:[%s299 + $0x88] sm:$0xff]
        %v362 = vld [vmem:[%s299 + $0x90] sm:$0xff]
        %v363 = vld [vmem:[%s299 + $0x98] sm:$0xff]
        %v364 = vld [vmem:[%s299 + $0xa0] sm:$0xff]
        %v365 = vld [vmem:[%s299 + $0xa8] sm:$0xff]
        %v366 = vld [vmem:[%s299 + $0xb0] sm:$0xff]
        %v367 = vld [vmem:[%s299 + $0xb8] sm:$0xff]
        %v368 = vld [vmem:[%s299 + $0xc0] sm:$0xff]
        %v369 = vld [vmem:[%s299 + $0xc8] sm:$0xff]
        %v370 = vld [vmem:[%s299 + $0xd0] sm:$0xff]
        %v371 = vld [vmem:[%s299 + $0xd8] sm:$0xff]
        %v372 = vld [vmem:[%s299 + $0xe0] sm:$0xff]
        %v373 = vld [vmem:[%s299 + $0xe8] sm:$0xff]
        %v374 = vld [vmem:[%s299 + $0xf0] sm:$0xff]
        %v375 = vld [vmem:[%s299 + $0xf8] sm:$0xff]
        %v376 = vld [vmem:[#allocation5] sm:$0xff]
        %v377 = vld [vmem:[#allocation5 + $0x8] sm:$0xff]
        %v378 = vld [vmem:[#allocation5 + $0x10] sm:$0xff]
        %v379 = vld [vmem:[#allocation5 + $0x18] sm:$0xff]
        %v380 = vld [vmem:[#allocation5 + $0x20] sm:$0xff]
        %v381 = vld [vmem:[#allocation5 + $0x28] sm:$0xff]
        %v382 = vld [vmem:[#allocation5 + $0x30] sm:$0xff]
        %v383 = vld [vmem:[#allocation5 + $0x38] sm:$0xff]
        %v384 = vld [vmem:[#allocation5 + $0x40] sm:$0xff]
        %v385 = vld [vmem:[#allocation5 + $0x48] sm:$0xff]
        %v386 = vld [vmem:[#allocation5 + $0x50] sm:$0xff]
        %v387 = vld [vmem:[#allocation5 + $0x58] sm:$0xff]
        %v388 = vld [vmem:[#allocation5 + $0x60] sm:$0xff]
        %v389 = vld [vmem:[#allocation5 + $0x68] sm:$0xff]
        %v390 = vld [vmem:[#allocation5 + $0x70] sm:$0xff]
        %v391 = vld [vmem:[#allocation5 + $0x78] sm:$0xff]
        %v392 = vld [vmem:[#allocation5 + $0x80] sm:$0xff]
        %v393 = vld [vmem:[#allocation5 + $0x88] sm:$0xff]
        %v394 = vld [vmem:[#allocation5 + $0x90] sm:$0xff]
        %v395 = vld [vmem:[#allocation5 + $0x98] sm:$0xff]
        %v396 = vld [vmem:[#allocation5 + $0xa0] sm:$0xff]
        %v397 = vld [vmem:[#allocation5 + $0xa8] sm:$0xff]
        %v398 = vld [vmem:[#allocation5 + $0xb0] sm:$0xff]
        %v399 = vld [vmem:[#allocation5 + $0xb8] sm:$0xff]
        %v400 = vld [vmem:[#allocation5 + $0xc0] sm:$0xff]
        %v401 = vld [vmem:[#allocation5 + $0xc8] sm:$0xff]
        %v402 = vld [vmem:[#allocation5 + $0xd0] sm:$0xff]
        %v403 = vld [vmem:[#allocation5 + $0xd8] sm:$0xff]
        %v404 = vld [vmem:[#allocation5 + $0xe0] sm:$0xff]
        %v405 = vld [vmem:[#allocation5 + $0xe8] sm:$0xff]
        %v406 = vld [vmem:[#allocation5 + $0xf0] sm:$0xff]
        %v407 = vld [vmem:[#allocation5 + $0xf8] sm:$0xff]
        %v408 = vld [vmem:[%s2] sm:$0x1]
        %v410 = vlaneseq
        %v411 = vshrl.u32 %v410, 7
        %v412 = vsub.s32 0, %v411
        %v413 = vrot.slane %v408, %v412
        %415 = vmatprep.subr.mxu0 0.0
        %416 = vmatpush1.msra.mxu0 %v376
        %417 = vmatprep.subr.mxu0 0.0
        %418 = vmatpush1.msra.mxu0 %v377
        %419 = vmatprep.subr.mxu0 0.0
        %420 = vmatpush1.msra.mxu0 %v378
        %421 = vmatprep.subr.mxu0 0.0
        %422 = vmatpush1.msra.mxu0 %v379
        %423 = vmatprep.subr.mxu0 0.0
        %424 = vmatpush1.msra.mxu0 %v380
        %425 = vmatprep.subr.mxu0 0.0
        %426 = vmatpush1.msra.mxu0 %v381
        %427 = vmatprep.subr.mxu0 0.0
        %428 = vmatpush1.msra.mxu0 %v382
        %429 = vmatprep.subr.mxu0 0.0
        %430 = vmatpush1.msra.mxu0 %v383
        %431 = vmatprep.subr.mxu0 0.0
        %432 = vmatpush1.msra.mxu0 %v384
        %433 = vmatprep.subr.mxu0 0.0
        %434 = vmatpush1.msra.mxu0 %v385
        %435 = vmatprep.subr.mxu0 0.0
        %436 = vmatpush1.msra.mxu0 %v386
        %437 = vmatprep.subr.mxu0 0.0
        %438 = vmatpush1.msra.mxu0 %v387
        %439 = vmatprep.subr.mxu0 0.0
        %440 = vmatpush1.msra.mxu0 %v388
        %441 = vmatprep.subr.mxu0 0.0
        %442 = vmatpush1.msra.mxu0 %v389
        %443 = vmatprep.subr.mxu0 0.0
        %444 = vmatpush1.msra.mxu0 %v390
        %445 = vmatprep.subr.mxu0 0.0
        %446 = vmatpush1.msra.mxu0 %v391
        %447 = vmatprep.subr.mxu0 0.0
        %448 = vmatpush1.msra.mxu0 %v392
        %449 = vmatprep.subr.mxu0 0.0
        %450 = vmatpush1.msra.mxu0 %v393
        %451 = vmatprep.subr.mxu0 0.0
        %452 = vmatpush1.msra.mxu0 %v394
        %453 = vmatprep.subr.mxu0 0.0
        %454 = vmatpush1.msra.mxu0 %v395
        %455 = vmatprep.subr.mxu0 0.0
        %456 = vmatpush1.msra.mxu0 %v396
        %457 = vmatprep.subr.mxu0 0.0
        %458 = vmatpush1.msra.mxu0 %v397
        %459 = vmatprep.subr.mxu0 0.0
        %460 = vmatpush1.msra.mxu0 %v398
        %461 = vmatprep.subr.mxu0 0.0
        %462 = vmatpush1.msra.mxu0 %v399
        %463 = vmatprep.subr.mxu0 0.0
        %464 = vmatpush1.msra.mxu0 %v400
        %465 = vmatprep.subr.mxu0 0.0
        %466 = vmatpush1.msra.mxu0 %v401
        %467 = vmatprep.subr.mxu0 0.0
        %468 = vmatpush1.msra.mxu0 %v402
        %469 = vmatprep.subr.mxu0 0.0
        %470 = vmatpush1.msra.mxu0 %v403
        %471 = vmatprep.subr.mxu0 0.0
        %472 = vmatpush1.msra.mxu0 %v404
        %473 = vmatprep.subr.mxu0 0.0
        %474 = vmatpush1.msra.mxu0 %v405
        %475 = vmatprep.subr.mxu0 0.0
        %476 = vmatpush1.msra.mxu0 %v406
        %477 = vmatprep.subr.mxu0 0.0
        %478 = vmatpush1.msra.mxu0 %v407
        %479 = vmatprep.mubr.f32.mxu0 %v345
        %480 = vmatmul.mubr.f32.gmra.mrb[0].mxu0 %v344
        %v481 = vpop.f32.mrb[0].mxu0
        %v482 = vadd.f32 %v413, %v481
        %v483 = vpop.f32.mrb[0].mxu0
        %484 = vmatprep.mubr.f32.mxu0 %v347
        %485 = vmatmul.mubr.f32.gmra.mrb[0].mxu0 %v346
        %v486 = vpop.f32.mrb[0].mxu0
        %v487 = vadd.f32 %v413, %v486
        %v488 = vpop.f32.mrb[0].mxu0
        %489 = vmatprep.mubr.f32.mxu0 %v349
        %490 = vmatmul.mubr.f32.gmra.mrb[0].mxu0 %v348
        %v491 = vpop.f32.mrb[0].mxu0
        %v492 = vadd.f32 %v413, %v491
        %v493 = vpop.f32.mrb[0].mxu0
        %494 = vmatprep.mubr.f32.mxu0 %v351
        %495 = vmatmul.mubr.f32.gmra.mrb[0].mxu0 %v350
        %v496 = vpop.f32.mrb[0].mxu0
        %v497 = vadd.f32 %v413, %v496
        %v498 = vpop.f32.mrb[0].mxu0
        %499 = vmatprep.mubr.f32.mxu0 %v353
        %500 = vmatmul.mubr.f32.gmra.mrb[0].mxu0 %v352
        %v501 = vpop.f32.mrb[0].mxu0
        %v502 = vadd.f32 %v413, %v501
        %v503 = vpop.f32.mrb[0].mxu0
        %504 = vmatprep.mubr.f32.mxu0 %v355
        %505 = vmatmul.mubr.f32.gmra.mrb[0].mxu0 %v354
        %v506 = vpop.f32.mrb[0].mxu0
        %v507 = vadd.f32 %v413, %v506
        %v508 = vpop.f32.mrb[0].mxu0
        %509 = vmatprep.mubr.f32.mxu0 %v357
        %510 = vmatmul.mubr.f32.gmra.mrb[0].mxu0 %v356
        %v511 = vpop.f32.mrb[0].mxu0
        %v512 = vadd.f32 %v413, %v511
        %v513 = vpop.f32.mrb[0].mxu0
        %514 = vmatprep.mubr.f32.mxu0 %v359
        %515 = vmatmul.mubr.f32.gmra.mrb[0].mxu0 %v358
        %v516 = vpop.f32.mrb[0].mxu0
        %v517 = vadd.f32 %v413, %v516
        %v518 = vpop.f32.mrb[0].mxu0
        %519 = vmatprep.mubr.f32.mxu0 %v361
        %520 = vmatmul.mubr.f32.gmra.mrb[0].mxu0 %v360
        %v521 = vpop.f32.mrb[0].mxu0
        %v522 = vadd.f32 %v413, %v521
        %v523 = vpop.f32.mrb[0].mxu0
        %524 = vmatprep.mubr.f32.mxu0 %v363
        %525 = vmatmul.mubr.f32.gmra.mrb[0].mxu0 %v362
        %v526 = vpop.f32.mrb[0].mxu0
        %v527 = vadd.f32 %v413, %v526
        %v528 = vpop.f32.mrb[0].mxu0
        %529 = vmatprep.mubr.f32.mxu0 %v365
        %530 = vmatmul.mubr.f32.gmra.mrb[0].mxu0 %v364
        %v531 = vpop.f32.mrb[0].mxu0
        %v532 = vadd.f32 %v413, %v531
        %v533 = vpop.f32.mrb[0].mxu0
        %534 = vmatprep.mubr.f32.mxu0 %v367
        %535 = vmatmul.mubr.f32.gmra.mrb[0].mxu0 %v366
        %v536 = vpop.f32.mrb[0].mxu0
        %v537 = vadd.f32 %v413, %v536
        %v538 = vpop.f32.mrb[0].mxu0
        %539 = vmatprep.mubr.f32.mxu0 %v369
        %540 = vmatmul.mubr.f32.gmra.mrb[0].mxu0 %v368
        %v541 = vpop.f32.mrb[0].mxu0
        %v542 = vadd.f32 %v413, %v541
        %v543 = vpop.f32.mrb[0].mxu0
        %544 = vmatprep.mubr.f32.mxu0 %v371
        %545 = vmatmul.mubr.f32.gmra.mrb[0].mxu0 %v370
        %v546 = vpop.f32.mrb[0].mxu0
        %v547 = vadd.f32 %v413, %v546
        %v548 = vpop.f32.mrb[0].mxu0
        %549 = vmatprep.mubr.f32.mxu0 %v373
        %550 = vmatmul.mubr.f32.gmra.mrb[0].mxu0 %v372
        %v551 = vpop.f32.mrb[0].mxu0
        %v552 = vadd.f32 %v413, %v551
        %v553 = vpop.f32.mrb[0].mxu0
        %554 = vmatprep.mubr.f32.mxu0 %v375
        %555 = vmatmul.mubr.f32.gmra.mrb[0].mxu0 %v374
        %v556 = vpop.f32.mrb[0].mxu0
        %v557 = vadd.f32 %v413, %v556
        %v558 = vpop.f32.mrb[0].mxu0
        %559 = vdwg.mxu0
        %v560 = vxor.u32 %v482, 2147483648
        %v561 = vxor.u32 %v487, 2147483648
        %v562 = vxor.u32 %v492, 2147483648
        %v563 = vxor.u32 %v497, 2147483648
        %v564 = vxor.u32 %v502, 2147483648
        %v565 = vxor.u32 %v507, 2147483648
        %v566 = vxor.u32 %v512, 2147483648
        %v567 = vxor.u32 %v517, 2147483648
        %v568 = vxor.u32 %v522, 2147483648
        %v569 = vxor.u32 %v527, 2147483648
        %v570 = vxor.u32 %v532, 2147483648
        %v571 = vxor.u32 %v537, 2147483648
        %v572 = vxor.u32 %v542, 2147483648
        %v573 = vxor.u32 %v547, 2147483648
        %v574 = vxor.u32 %v552, 2147483648
        %v575 = vxor.u32 %v557, 2147483648
        %v576 = vmul.f32 %v560, 1.442695
        %v577 = vpow.pop %v576
        %v578 = vmul.f32 %v561, 1.442695
        %v579 = vpow.pop %v578
        %v580 = vmul.f32 %v562, 1.442695
        %v581 = vpow.pop %v580
        %v582 = vmul.f32 %v563, 1.442695
        %v583 = vpow.pop %v582
        %v584 = vmul.f32 %v564, 1.442695
        %v585 = vpow.pop %v584
        %v586 = vmul.f32 %v565, 1.442695
        %v587 = vpow.pop %v586
        %v588 = vmul.f32 %v566, 1.442695
        %v589 = vpow.pop %v588
        %v590 = vmul.f32 %v567, 1.442695
        %v591 = vpow.pop %v590
        %v592 = vmul.f32 %v568, 1.442695
        %v593 = vpow.pop %v592
        %v594 = vmul.f32 %v569, 1.442695
        %v595 = vpow.pop %v594
        %v596 = vmul.f32 %v570, 1.442695
        %v597 = vpow.pop %v596
        %v598 = vmul.f32 %v571, 1.442695
        %v599 = vpow.pop %v598
        %v600 = vmul.f32 %v572, 1.442695
        %v601 = vpow.pop %v600
        %v602 = vmul.f32 %v573, 1.442695
        %v603 = vpow.pop %v602
        %v604 = vmul.f32 %v574, 1.442695
        %v605 = vpow.pop %v604
        %v606 = vmul.f32 %v575, 1.442695
        %v607 = vpow.pop %v606
        %v608 = vadd.f32 %v577, 1.0
        %v609 = vadd.f32 %v579, 1.0
        %v610 = vadd.f32 %v581, 1.0
        %v611 = vadd.f32 %v583, 1.0
        %v612 = vadd.f32 %v585, 1.0
        %v613 = vadd.f32 %v587, 1.0
        %v614 = vadd.f32 %v589, 1.0
        %v615 = vadd.f32 %v591, 1.0
        %v616 = vadd.f32 %v593, 1.0
        %v617 = vadd.f32 %v595, 1.0
        %v618 = vadd.f32 %v597, 1.0
        %v619 = vadd.f32 %v599, 1.0
        %v620 = vadd.f32 %v601, 1.0
        %v621 = vadd.f32 %v603, 1.0
        %v622 = vadd.f32 %v605, 1.0
        %v623 = vadd.f32 %v607, 1.0
        %v624 = vrcp.pop %v608
        %v625 = vmul.f32 1.0, %v624
        %v626 = vrcp.pop %v609
        %v627 = vmul.f32 1.0, %v626
        %v628 = vrcp.pop %v610
        %v629 = vmul.f32 1.0, %v628
        %v630 = vrcp.pop %v611
        %v631 = vmul.f32 1.0, %v630
        %v632 = vrcp.pop %v612
        %v633 = vmul.f32 1.0, %v632
        %v634 = vrcp.pop %v613
        %v635 = vmul.f32 1.0, %v634
        %v636 = vrcp.pop %v614
        %v637 = vmul.f32 1.0, %v636
        %v638 = vrcp.pop %v615
        %v639 = vmul.f32 1.0, %v638
        %v640 = vrcp.pop %v616
        %v641 = vmul.f32 1.0, %v640
        %v642 = vrcp.pop %v617
        %v643 = vmul.f32 1.0, %v642
        %v644 = vrcp.pop %v618
        %v645 = vmul.f32 1.0, %v644
        %v646 = vrcp.pop %v619
        %v647 = vmul.f32 1.0, %v646
        %v648 = vrcp.pop %v620
        %v649 = vmul.f32 1.0, %v648
        %v650 = vrcp.pop %v621
        %v651 = vmul.f32 1.0, %v650
        %v652 = vrcp.pop %v622
        %v653 = vmul.f32 1.0, %v652
        %v654 = vrcp.pop %v623
        %v655 = vmul.f32 1.0, %v654
        %v656 = vld [vmem:[#allocation7] sm:$0xff]
        %v657 = vld [vmem:[#allocation7 + $0x8] sm:$0xff]
        %v658 = vld [vmem:[#allocation7 + $0x10] sm:$0xff]
        %v659 = vld [vmem:[#allocation7 + $0x18] sm:$0xff]
        %v660 = vld [vmem:[#allocation7 + $0x20] sm:$0xff]
        %v661 = vld [vmem:[#allocation7 + $0x28] sm:$0xff]
        %v662 = vld [vmem:[#allocation7 + $0x30] sm:$0xff]
        %v663 = vld [vmem:[#allocation7 + $0x38] sm:$0xff]
        %v664 = vld [vmem:[#allocation7 + $0x40] sm:$0xff]
        %v665 = vld [vmem:[#allocation7 + $0x48] sm:$0xff]
        %v666 = vld [vmem:[#allocation7 + $0x50] sm:$0xff]
        %v667 = vld [vmem:[#allocation7 + $0x58] sm:$0xff]
        %v668 = vld [vmem:[#allocation7 + $0x60] sm:$0xff]
        %v669 = vld [vmem:[#allocation7 + $0x68] sm:$0xff]
        %v670 = vld [vmem:[#allocation7 + $0x70] sm:$0xff]
        %v671 = vld [vmem:[#allocation7 + $0x78] sm:$0xff]
        %v672 = vld [vmem:[%s4] sm:$0x1]
        %v674 = vlaneseq
        %v675 = vshrl.u32 %v674, 7
        %v676 = vsub.s32 0, %v675
        %v677 = vrot.slane %v672, %v676
        %679 = vmatprep.subr.mxu0 0.0
        %680 = vmatpush1.msra.mxu0 %v656
        %681 = vmatprep.subr.mxu0 0.0
        %682 = vmatpush1.msra.mxu0 %v657
        %683 = vmatprep.subr.mxu0 0.0
        %684 = vmatpush1.msra.mxu0 %v658
        %685 = vmatprep.subr.mxu0 0.0
        %686 = vmatpush1.msra.mxu0 %v659
        %687 = vmatprep.subr.mxu0 0.0
        %688 = vmatpush1.msra.mxu0 %v660
        %689 = vmatprep.subr.mxu0 0.0
        %690 = vmatpush1.msra.mxu0 %v661
        %691 = vmatprep.subr.mxu0 0.0
        %692 = vmatpush1.msra.mxu0 %v662
        %693 = vmatprep.subr.mxu0 0.0
        %694 = vmatpush1.msra.mxu0 %v663
        %695 = vmatprep.subr.mxu0 0.0
        %696 = vmatpush1.msra.mxu0 %v664
        %697 = vmatprep.subr.mxu0 0.0
        %698 = vmatpush1.msra.mxu0 %v665
        %699 = vmatprep.subr.mxu0 0.0
        %700 = vmatpush1.msra.mxu0 %v666
        %701 = vmatprep.subr.mxu0 0.0
        %702 = vmatpush1.msra.mxu0 %v667
        %703 = vmatprep.subr.mxu0 0.0
        %704 = vmatpush1.msra.mxu0 %v668
        %705 = vmatprep.subr.mxu0 0.0
        %706 = vmatpush1.msra.mxu0 %v669
        %707 = vmatprep.subr.mxu0 0.0
        %708 = vmatpush1.msra.mxu0 %v670
        %709 = vmatprep.subr.mxu0 0.0
        %710 = vmatpush1.msra.mxu0 %v671
        %711 = vmatprep.subr.mxu0 0.0
        %712 = vmatpush1.msra.mxu0 0.0
        %713 = vmatprep.subr.mxu0 0.0
        %714 = vmatpush1.msra.mxu0 0.0
        %715 = vmatprep.subr.mxu0 0.0
        %716 = vmatpush1.msra.mxu0 0.0
        %717 = vmatprep.subr.mxu0 0.0
        %718 = vmatpush1.msra.mxu0 0.0
        %719 = vmatprep.subr.mxu0 0.0
        %720 = vmatpush1.msra.mxu0 0.0
        %721 = vmatprep.subr.mxu0 0.0
        %722 = vmatpush1.msra.mxu0 0.0
        %723 = vmatprep.subr.mxu0 0.0
        %724 = vmatpush1.msra.mxu0 0.0
        %725 = vmatprep.subr.mxu0 0.0
        %726 = vmatpush1.msra.mxu0 0.0
        %727 = vmatprep.subr.mxu0 0.0
        %728 = vmatpush1.msra.mxu0 0.0
        %729 = vmatprep.subr.mxu0 0.0
        %730 = vmatpush1.msra.mxu0 0.0
        %731 = vmatprep.subr.mxu0 0.0
        %732 = vmatpush1.msra.mxu0 0.0
        %733 = vmatprep.subr.mxu0 0.0
        %734 = vmatpush1.msra.mxu0 0.0
        %735 = vmatprep.subr.mxu0 0.0
        %736 = vmatpush1.msra.mxu0 0.0
        %737 = vmatprep.subr.mxu0 0.0
        %738 = vmatpush1.msra.mxu0 0.0
        %739 = vmatprep.subr.mxu0 0.0
        %740 = vmatpush1.msra.mxu0 0.0
        %741 = vmatprep.subr.mxu0 0.0
        %742 = vmatpush1.msra.mxu0 0.0
        %743 = vmatprep.mubr.f32.mxu0 0.0
        %744 = vmatmul.mubr.f32.gmra.mrb[0].mxu0 %v625
        %v745 = vpop.f32.mrb[0].mxu0
        %v746 = vadd.f32 %v677, %v745
        %v747 = vpop.f32.mrb[0].mxu0
        %748 = vmatprep.mubr.f32.mxu0 0.0
        %749 = vmatmul.mubr.f32.gmra.mrb[0].mxu0 %v627
        %v750 = vpop.f32.mrb[0].mxu0
        %v751 = vadd.f32 %v677, %v750
        %v752 = vpop.f32.mrb[0].mxu0
        %753 = vmatprep.mubr.f32.mxu0 0.0
        %754 = vmatmul.mubr.f32.gmra.mrb[0].mxu0 %v629
        %v755 = vpop.f32.mrb[0].mxu0
        %v756 = vadd.f32 %v677, %v755
        %v757 = vpop.f32.mrb[0].mxu0
        %758 = vmatprep.mubr.f32.mxu0 0.0
        %759 = vmatmul.mubr.f32.gmra.mrb[0].mxu0 %v631
        %v760 = vpop.f32.mrb[0].mxu0
        %v761 = vadd.f32 %v677, %v760
        %v762 = vpop.f32.mrb[0].mxu0
        %763 = vmatprep.mubr.f32.mxu0 0.0
        %764 = vmatmul.mubr.f32.gmra.mrb[0].mxu0 %v633
        %v765 = vpop.f32.mrb[0].mxu0
        %v766 = vadd.f32 %v677, %v765
        %v767 = vpop.f32.mrb[0].mxu0
        %768 = vmatprep.mubr.f32.mxu0 0.0
        %769 = vmatmul.mubr.f32.gmra.mrb[0].mxu0 %v635
        %v770 = vpop.f32.mrb[0].mxu0
        %v771 = vadd.f32 %v677, %v770
        %v772 = vpop.f32.mrb[0].mxu0
        %773 = vmatprep.mubr.f32.mxu0 0.0
        %774 = vmatmul.mubr.f32.gmra.mrb[0].mxu0 %v637
        %v775 = vpop.f32.mrb[0].mxu0
        %v776 = vadd.f32 %v677, %v775
        %v777 = vpop.f32.mrb[0].mxu0
        %778 = vmatprep.mubr.f32.mxu0 0.0
        %779 = vmatmul.mubr.f32.gmra.mrb[0].mxu0 %v639
        %v780 = vpop.f32.mrb[0].mxu0
        %v781 = vadd.f32 %v677, %v780
        %v782 = vpop.f32.mrb[0].mxu0
        %783 = vmatprep.mubr.f32.mxu0 0.0
        %784 = vmatmul.mubr.f32.gmra.mrb[0].mxu0 %v641
        %v785 = vpop.f32.mrb[0].mxu0
        %v786 = vadd.f32 %v677, %v785
        %v787 = vpop.f32.mrb[0].mxu0
        %788 = vmatprep.mubr.f32.mxu0 0.0
        %789 = vmatmul.mubr.f32.gmra.mrb[0].mxu0 %v643
        %v790 = vpop.f32.mrb[0].mxu0
        %v791 = vadd.f32 %v677, %v790
        %v792 = vpop.f32.mrb[0].mxu0
        %793 = vmatprep.mubr.f32.mxu0 0.0
        %794 = vmatmul.mubr.f32.gmra.mrb[0].mxu0 %v645
        %v795 = vpop.f32.mrb[0].mxu0
        %v796 = vadd.f32 %v677, %v795
        %v797 = vpop.f32.mrb[0].mxu0
        %798 = vmatprep.mubr.f32.mxu0 0.0
        %799 = vmatmul.mubr.f32.gmra.mrb[0].mxu0 %v647
        %v800 = vpop.f32.mrb[0].mxu0
        %v801 = vadd.f32 %v677, %v800
        %v802 = vpop.f32.mrb[0].mxu0
        %803 = vmatprep.mubr.f32.mxu0 0.0
        %804 = vmatmul.mubr.f32.gmra.mrb[0].mxu0 %v649
        %v805 = vpop.f32.mrb[0].mxu0
        %v806 = vadd.f32 %v677, %v805
        %v807 = vpop.f32.mrb[0].mxu0
        %808 = vmatprep.mubr.f32.mxu0 0.0
        %809 = vmatmul.mubr.f32.gmra.mrb[0].mxu0 %v651
        %v810 = vpop.f32.mrb[0].mxu0
        %v811 = vadd.f32 %v677, %v810
        %v812 = vpop.f32.mrb[0].mxu0
        %813 = vmatprep.mubr.f32.mxu0 0.0
        %814 = vmatmul.mubr.f32.gmra.mrb[0].mxu0 %v653
        %v815 = vpop.f32.mrb[0].mxu0
        %v816 = vadd.f32 %v677, %v815
        %v817 = vpop.f32.mrb[0].mxu0
        %818 = vmatprep.mubr.f32.mxu0 0.0
        %819 = vmatmul.mubr.f32.gmra.mrb[0].mxu0 %v655
        %v820 = vpop.f32.mrb[0].mxu0
        %v821 = vadd.f32 %v677, %v820
        %v822 = vpop.f32.mrb[0].mxu0
        %823 = vdwg.mxu0
        %v824 = vxor.u32 %v746, 2147483648
        %v825 = vxor.u32 %v751, 2147483648
        %v826 = vxor.u32 %v756, 2147483648
        %v827 = vxor.u32 %v761, 2147483648
        %v828 = vxor.u32 %v766, 2147483648
        %v829 = vxor.u32 %v771, 2147483648
        %v830 = vxor.u32 %v776, 2147483648
        %v831 = vxor.u32 %v781, 2147483648
        %v832 = vxor.u32 %v786, 2147483648
        %v833 = vxor.u32 %v791, 2147483648
        %v834 = vxor.u32 %v796, 2147483648
        %v835 = vxor.u32 %v801, 2147483648
        %v836 = vxor.u32 %v806, 2147483648
        %v837 = vxor.u32 %v811, 2147483648
        %v838 = vxor.u32 %v816, 2147483648
        %v839 = vxor.u32 %v821, 2147483648
        %v840 = vmul.f32 %v824, 1.442695
        %v841 = vpow.pop %v840
        %v842 = vmul.f32 %v825, 1.442695
        %v843 = vpow.pop %v842
        %v844 = vmul.f32 %v826, 1.442695
        %v845 = vpow.pop %v844
        %v846 = vmul.f32 %v827, 1.442695
        %v847 = vpow.pop %v846
        %v848 = vmul.f32 %v828, 1.442695
        %v849 = vpow.pop %v848
        %v850 = vmul.f32 %v829, 1.442695
        %v851 = vpow.pop %v850
        %v852 = vmul.f32 %v830, 1.442695
        %v853 = vpow.pop %v852
        %v854 = vmul.f32 %v831, 1.442695
        %v855 = vpow.pop %v854
        %v856 = vmul.f32 %v832, 1.442695
        %v857 = vpow.pop %v856
        %v858 = vmul.f32 %v833, 1.442695
        %v859 = vpow.pop %v858
        %v860 = vmul.f32 %v834, 1.442695
        %v861 = vpow.pop %v860
        %v862 = vmul.f32 %v835, 1.442695
        %v863 = vpow.pop %v862
        %v864 = vmul.f32 %v836, 1.442695
        %v865 = vpow.pop %v864
        %v866 = vmul.f32 %v837, 1.442695
        %v867 = vpow.pop %v866
        %v868 = vmul.f32 %v838, 1.442695
        %v869 = vpow.pop %v868
        %v870 = vmul.f32 %v839, 1.442695
        %v871 = vpow.pop %v870
        %v872 = vadd.f32 %v841, 1.0
        %v873 = vadd.f32 %v843, 1.0
        %v874 = vadd.f32 %v845, 1.0
        %v875 = vadd.f32 %v847, 1.0
        %v876 = vadd.f32 %v849, 1.0
        %v877 = vadd.f32 %v851, 1.0
        %v878 = vadd.f32 %v853, 1.0
        %v879 = vadd.f32 %v855, 1.0
        %v880 = vadd.f32 %v857, 1.0
        %v881 = vadd.f32 %v859, 1.0
        %v882 = vadd.f32 %v861, 1.0
        %v883 = vadd.f32 %v863, 1.0
        %v884 = vadd.f32 %v865, 1.0
        %v885 = vadd.f32 %v867, 1.0
        %v886 = vadd.f32 %v869, 1.0
        %v887 = vadd.f32 %v871, 1.0
        %v888 = vrcp.pop %v872
        %v889 = vmul.f32 1.0, %v888
        %v890 = vrcp.pop %v873
        %v891 = vmul.f32 1.0, %v890
        %v892 = vrcp.pop %v874
        %v893 = vmul.f32 1.0, %v892
        %v894 = vrcp.pop %v875
        %v895 = vmul.f32 1.0, %v894
        %v896 = vrcp.pop %v876
        %v897 = vmul.f32 1.0, %v896
        %v898 = vrcp.pop %v877
        %v899 = vmul.f32 1.0, %v898
        %v900 = vrcp.pop %v878
        %v901 = vmul.f32 1.0, %v900
        %v902 = vrcp.pop %v879
        %v903 = vmul.f32 1.0, %v902
        %v904 = vrcp.pop %v880
        %v905 = vmul.f32 1.0, %v904
        %v906 = vrcp.pop %v881
        %v907 = vmul.f32 1.0, %v906
        %v908 = vrcp.pop %v882
        %v909 = vmul.f32 1.0, %v908
        %v910 = vrcp.pop %v883
        %v911 = vmul.f32 1.0, %v910
        %v912 = vrcp.pop %v884
        %v913 = vmul.f32 1.0, %v912
        %v914 = vrcp.pop %v885
        %v915 = vmul.f32 1.0, %v914
        %v916 = vrcp.pop %v886
        %v917 = vmul.f32 1.0, %v916
        %v918 = vrcp.pop %v887
        %v919 = vmul.f32 1.0, %v918
        %v920 = vld [vmem:[#allocation8] sm:$0xff]
        %v921 = vld [vmem:[#allocation8 + $0x8] sm:$0xff]
        %v922 = vld [vmem:[#allocation8 + $0x10] sm:$0xff]
        %v923 = vld [vmem:[#allocation8 + $0x18] sm:$0xff]
        %v924 = vld [vmem:[#allocation8 + $0x20] sm:$0xff]
        %v925 = vld [vmem:[#allocation8 + $0x28] sm:$0xff]
        %v926 = vld [vmem:[#allocation8 + $0x30] sm:$0xff]
        %v927 = vld [vmem:[#allocation8 + $0x38] sm:$0xff]
        %v928 = vld [vmem:[#allocation8 + $0x40] sm:$0xff]
        %v929 = vld [vmem:[#allocation8 + $0x48] sm:$0xff]
        %v930 = vld [vmem:[#allocation8 + $0x50] sm:$0xff]
        %v931 = vld [vmem:[#allocation8 + $0x58] sm:$0xff]
        %v932 = vld [vmem:[#allocation8 + $0x60] sm:$0xff]
        %v933 = vld [vmem:[#allocation8 + $0x68] sm:$0xff]
        %v934 = vld [vmem:[#allocation8 + $0x70] sm:$0xff]
        %v935 = vld [vmem:[#allocation8 + $0x78] sm:$0xff]
        %v936 = vld [vmem:[#allocation8 + $0x80] sm:$0xff]
        %v937 = vld [vmem:[#allocation8 + $0x88] sm:$0xff]
        %v938 = vld [vmem:[#allocation8 + $0x90] sm:$0xff]
        %v939 = vld [vmem:[#allocation8 + $0x98] sm:$0xff]
        %v940 = vld [vmem:[#allocation8 + $0xa0] sm:$0xff]
        %v941 = vld [vmem:[#allocation8 + $0xa8] sm:$0xff]
        %v942 = vld [vmem:[#allocation8 + $0xb0] sm:$0xff]
        %v943 = vld [vmem:[#allocation8 + $0xb8] sm:$0xff]
        %v944 = vld [vmem:[#allocation8 + $0xc0] sm:$0xff]
        %v945 = vld [vmem:[#allocation8 + $0xc8] sm:$0xff]
        %v946 = vld [vmem:[#allocation8 + $0xd0] sm:$0xff]
        %v947 = vld [vmem:[#allocation8 + $0xd8] sm:$0xff]
        %v948 = vld [vmem:[#allocation8 + $0xe0] sm:$0xff]
        %v949 = vld [vmem:[#allocation8 + $0xe8] sm:$0xff]
        %v950 = vld [vmem:[#allocation8 + $0xf0] sm:$0xff]
        %v951 = vld [vmem:[#allocation8 + $0xf8] sm:$0xff]
        %v952 = vld [vmem:[%s6] sm:$0x3]
        %v954 = vlaneseq
        %v955 = vshrl.u32 %v954, 7
        %v956 = vsub.s32 0, %v955
        %v957 = vrot.slane %v952, %v956
        %v958 = vlaneseq
        %v959 = vshrl.u32 %v958, 7
        %v960 = vsub.s32 1, %v959
        %v961 = vrot.slane %v952, %v960
        %964 = vmatprep.subr.mxu0 %v921
        %965 = vmatpush1.msra.mxu0 %v920
        %966 = vmatprep.subr.mxu0 %v923
        %967 = vmatpush1.msra.mxu0 %v922
        %968 = vmatprep.subr.mxu0 %v925
        %969 = vmatpush1.msra.mxu0 %v924
        %970 = vmatprep.subr.mxu0 %v927
        %971 = vmatpush1.msra.mxu0 %v926
        %972 = vmatprep.subr.mxu0 %v929
        %973 = vmatpush1.msra.mxu0 %v928
        %974 = vmatprep.subr.mxu0 %v931
        %975 = vmatpush1.msra.mxu0 %v930
        %976 = vmatprep.subr.mxu0 %v933
        %977 = vmatpush1.msra.mxu0 %v932
        %978 = vmatprep.subr.mxu0 %v935
        %979 = vmatpush1.msra.mxu0 %v934
        %980 = vmatprep.subr.mxu0 %v937
        %981 = vmatpush1.msra.mxu0 %v936
        %982 = vmatprep.subr.mxu0 %v939
        %983 = vmatpush1.msra.mxu0 %v938
        %984 = vmatprep.subr.mxu0 %v941
        %985 = vmatpush1.msra.mxu0 %v940
        %986 = vmatprep.subr.mxu0 %v943
        %987 = vmatpush1.msra.mxu0 %v942
        %988 = vmatprep.subr.mxu0 %v945
        %989 = vmatpush1.msra.mxu0 %v944
        %990 = vmatprep.subr.mxu0 %v947
        %991 = vmatpush1.msra.mxu0 %v946
        %992 = vmatprep.subr.mxu0 %v949
        %993 = vmatpush1.msra.mxu0 %v948
        %994 = vmatprep.subr.mxu0 %v951
        %995 = vmatpush1.msra.mxu0 %v950
        %996 = vmatprep.subr.mxu0 0.0
        %997 = vmatpush1.msra.mxu0 0.0
        %998 = vmatprep.subr.mxu0 0.0
        %999 = vmatpush1.msra.mxu0 0.0
        %1000 = vmatprep.subr.mxu0 0.0
        %1001 = vmatpush1.msra.mxu0 0.0
        %1002 = vmatprep.subr.mxu0 0.0
        %1003 = vmatpush1.msra.mxu0 0.0
        %1004 = vmatprep.subr.mxu0 0.0
        %1005 = vmatpush1.msra.mxu0 0.0
        %1006 = vmatprep.subr.mxu0 0.0
        %1007 = vmatpush1.msra.mxu0 0.0
        %1008 = vmatprep.subr.mxu0 0.0
        %1009 = vmatpush1.msra.mxu0 0.0
        %1010 = vmatprep.subr.mxu0 0.0
        %1011 = vmatpush1.msra.mxu0 0.0
        %1012 = vmatprep.subr.mxu0 0.0
        %1013 = vmatpush1.msra.mxu0 0.0
        %1014 = vmatprep.subr.mxu0 0.0
        %1015 = vmatpush1.msra.mxu0 0.0
        %1016 = vmatprep.subr.mxu0 0.0
        %1017 = vmatpush1.msra.mxu0 0.0
        %1018 = vmatprep.subr.mxu0 0.0
        %1019 = vmatpush1.msra.mxu0 0.0
        %1020 = vmatprep.subr.mxu0 0.0
        %1021 = vmatpush1.msra.mxu0 0.0
        %1022 = vmatprep.subr.mxu0 0.0
        %1023 = vmatpush1.msra.mxu0 0.0
        %1024 = vmatprep.subr.mxu0 0.0
        %1025 = vmatpush1.msra.mxu0 0.0
        %1026 = vmatprep.subr.mxu0 0.0
        %1027 = vmatpush1.msra.mxu0 0.0
        %1028 = vmatprep.mubr.f32.mxu0 0.0
        %1029 = vmatmul.mubr.f32.gmra.mrb[0].mxu0 %v889
        %v1030 = vpop.f32.mrb[0].mxu0
        %v1031 = vadd.f32 %v957, %v1030
        %v1032 = vpop.f32.mrb[0].mxu0
        %v1033 = vadd.f32 %v961, %v1032
        %1034 = vmatprep.mubr.f32.mxu0 0.0
        %1035 = vmatmul.mubr.f32.gmra.mrb[0].mxu0 %v891
        %v1036 = vpop.f32.mrb[0].mxu0
        %v1037 = vadd.f32 %v957, %v1036
        %v1038 = vpop.f32.mrb[0].mxu0
        %v1039 = vadd.f32 %v961, %v1038
        %1040 = vmatprep.mubr.f32.mxu0 0.0
        %1041 = vmatmul.mubr.f32.gmra.mrb[0].mxu0 %v893
        %v1042 = vpop.f32.mrb[0].mxu0
        %v1043 = vadd.f32 %v957, %v1042
        %v1044 = vpop.f32.mrb[0].mxu0
        %v1045 = vadd.f32 %v961, %v1044
        %1046 = vmatprep.mubr.f32.mxu0 0.0
        %1047 = vmatmul.mubr.f32.gmra.mrb[0].mxu0 %v895
        %v1048 = vpop.f32.mrb[0].mxu0
        %v1049 = vadd.f32 %v957, %v1048
        %v1050 = vpop.f32.mrb[0].mxu0
        %v1051 = vadd.f32 %v961, %v1050
        %1052 = vmatprep.mubr.f32.mxu0 0.0
        %1053 = vmatmul.mubr.f32.gmra.mrb[0].mxu0 %v897
        %v1054 = vpop.f32.mrb[0].mxu0
        %v1055 = vadd.f32 %v957, %v1054
        %v1056 = vpop.f32.mrb[0].mxu0
        %v1057 = vadd.f32 %v961, %v1056
        %1058 = vmatprep.mubr.f32.mxu0 0.0
        %1059 = vmatmul.mubr.f32.gmra.mrb[0].mxu0 %v899
        %v1060 = vpop.f32.mrb[0].mxu0
        %v1061 = vadd.f32 %v957, %v1060
        %v1062 = vpop.f32.mrb[0].mxu0
        %v1063 = vadd.f32 %v961, %v1062
        %1064 = vmatprep.mubr.f32.mxu0 0.0
        %1065 = vmatmul.mubr.f32.gmra.mrb[0].mxu0 %v901
        %v1066 = vpop.f32.mrb[0].mxu0
        %v1067 = vadd.f32 %v957, %v1066
        %v1068 = vpop.f32.mrb[0].mxu0
        %v1069 = vadd.f32 %v961, %v1068
        %1070 = vmatprep.mubr.f32.mxu0 0.0
        %1071 = vmatmul.mubr.f32.gmra.mrb[0].mxu0 %v903
        %v1072 = vpop.f32.mrb[0].mxu0
        %v1073 = vadd.f32 %v957, %v1072
        %v1074 = vpop.f32.mrb[0].mxu0
        %v1075 = vadd.f32 %v961, %v1074
        %1076 = vmatprep.mubr.f32.mxu0 0.0
        %1077 = vmatmul.mubr.f32.gmra.mrb[0].mxu0 %v905
        %v1078 = vpop.f32.mrb[0].mxu0
        %v1079 = vadd.f32 %v957, %v1078
        %v1080 = vpop.f32.mrb[0].mxu0
        %v1081 = vadd.f32 %v961, %v1080
        %1082 = vmatprep.mubr.f32.mxu0 0.0
        %1083 = vmatmul.mubr.f32.gmra.mrb[0].mxu0 %v907
        %v1084 = vpop.f32.mrb[0].mxu0
        %v1085 = vadd.f32 %v957, %v1084
        %v1086 = vpop.f32.mrb[0].mxu0
        %v1087 = vadd.f32 %v961, %v1086
        %1088 = vmatprep.mubr.f32.mxu0 0.0
        %1089 = vmatmul.mubr.f32.gmra.mrb[0].mxu0 %v909
        %v1090 = vpop.f32.mrb[0].mxu0
        %v1091 = vadd.f32 %v957, %v1090
        %v1092 = vpop.f32.mrb[0].mxu0
        %v1093 = vadd.f32 %v961, %v1092
        %1094 = vmatprep.mubr.f32.mxu0 0.0
        %1095 = vmatmul.mubr.f32.gmra.mrb[0].mxu0 %v911
        %v1096 = vpop.f32.mrb[0].mxu0
        %v1097 = vadd.f32 %v957, %v1096
        %v1098 = vpop.f32.mrb[0].mxu0
        %v1099 = vadd.f32 %v961, %v1098
        %1100 = vmatprep.mubr.f32.mxu0 0.0
        %1101 = vmatmul.mubr.f32.gmra.mrb[0].mxu0 %v913
        %v1102 = vpop.f32.mrb[0].mxu0
        %v1103 = vadd.f32 %v957, %v1102
        %v1104 = vpop.f32.mrb[0].mxu0
        %v1105 = vadd.f32 %v961, %v1104
        %1106 = vmatprep.mubr.f32.mxu0 0.0
        %1107 = vmatmul.mubr.f32.gmra.mrb[0].mxu0 %v915
        %v1108 = vpop.f32.mrb[0].mxu0
        %v1109 = vadd.f32 %v957, %v1108
        %v1110 = vpop.f32.mrb[0].mxu0
        %v1111 = vadd.f32 %v961, %v1110
        %1112 = vmatprep.mubr.f32.mxu0 0.0
        %1113 = vmatmul.mubr.f32.gmra.mrb[0].mxu0 %v917
        %v1114 = vpop.f32.mrb[0].mxu0
        %v1115 = vadd.f32 %v957, %v1114
        %v1116 = vpop.f32.mrb[0].mxu0
        %v1117 = vadd.f32 %v961, %v1116
        %1118 = vmatprep.mubr.f32.mxu0 0.0
        %1119 = vmatmul.mubr.f32.gmra.mrb[0].mxu0 %v919
        %v1120 = vpop.f32.mrb[0].mxu0
        %v1121 = vadd.f32 %v957, %v1120
        %v1122 = vpop.f32.mrb[0].mxu0
        %v1123 = vadd.f32 %v961, %v1122
        %1124 = vdwg.mxu0
        %1125 = vst [vmem:[%s341] sm:$0xff] %v1031
        %1126 = vst [vmem:[%s341 + $0x8] sm:$0xff] %v1033
        %1127 = vst [vmem:[%s341 + $0x10] sm:$0xff] %v1037
        %1128 = vst [vmem:[%s341 + $0x18] sm:$0xff] %v1039
        %1129 = vst [vmem:[%s341 + $0x20] sm:$0xff] %v1043
        %1130 = vst [vmem:[%s341 + $0x28] sm:$0xff] %v1045
        %1131 = vst [vmem:[%s341 + $0x30] sm:$0xff] %v1049
        %1132 = vst [vmem:[%s341 + $0x38] sm:$0xff] %v1051
        %1133 = vst [vmem:[%s341 + $0x40] sm:$0xff] %v1055
        %1134 = vst [vmem:[%s341 + $0x48] sm:$0xff] %v1057
        %1135 = vst [vmem:[%s341 + $0x50] sm:$0xff] %v1061
        %1136 = vst [vmem:[%s341 + $0x58] sm:$0xff] %v1063
        %1137 = vst [vmem:[%s341 + $0x60] sm:$0xff] %v1067
        %1138 = vst [vmem:[%s341 + $0x68] sm:$0xff] %v1069
        %1139 = vst [vmem:[%s341 + $0x70] sm:$0xff] %v1073
        %1140 = vst [vmem:[%s341 + $0x78] sm:$0xff] %v1075
        %1141 = vst [vmem:[%s341 + $0x80] sm:$0xff] %v1079
        %1142 = vst [vmem:[%s341 + $0x88] sm:$0xff] %v1081
        %1143 = vst [vmem:[%s341 + $0x90] sm:$0xff] %v1085
        %1144 = vst [vmem:[%s341 + $0x98] sm:$0xff] %v1087
        %1145 = vst [vmem:[%s341 + $0xa0] sm:$0xff] %v1091
        %1146 = vst [vmem:[%s341 + $0xa8] sm:$0xff] %v1093
        %1147 = vst [vmem:[%s341 + $0xb0] sm:$0xff] %v1097
        %1148 = vst [vmem:[%s341 + $0xb8] sm:$0xff] %v1099
        %1149 = vst [vmem:[%s341 + $0xc0] sm:$0xff] %v1103
        %1150 = vst [vmem:[%s341 + $0xc8] sm:$0xff] %v1105
        %1151 = vst [vmem:[%s341 + $0xd0] sm:$0xff] %v1109
        %1152 = vst [vmem:[%s341 + $0xd8] sm:$0xff] %v1111
        %1153 = vst [vmem:[%s341 + $0xe0] sm:$0xff] %v1115
        %1154 = vst [vmem:[%s341 + $0xe8] sm:$0xff] %v1117
        %1155 = vst [vmem:[%s341 + $0xf0] sm:$0xff] %v1121
        %1156 = vst [vmem:[%s341 + $0xf8] sm:$0xff] %v1123
        %s1157 = sand.u32 %s186, 1
        %s1158 = scalar_lea.sflag [#allocation4], %s1157
        %s1159 = sand.u32 %s186, 1
        %s1160 = smul.addr %s1159, 256
        %s1161 = scalar_lea.vmem [#allocation10], %s1160
        // Predicated region
        $region65: #{tpu_custom_call.1} parent=47 // pred_check
          %p1162 = pneg %p196
        $region66: #{tpu_custom_call.1} parent=47 // pred_check_branch
          %1164 = sbr.rel (%p1162) target = $region68
        $region67: #{tpu_custom_call.1} parent=47 // pred_region
          %s1165 = smul.u32 16, %s26
          %s1167 = ssub.s32 4096, 4096
          %1168 = vsyncadd %s1158, %s1167
          %s1169 = smul.addr %s1165, 2
          %s1170 = smul.addr %s1169, 128
          %s1171 = scalar_lea.hbm %s7, %s1170
          %s1172 = sshll.u32 %s1161, 4
          %s1173 = int_to_ptr.vmem [resolvable:$true] %s1172
          %1178 = dma.vmem_to_hbm [thread:$0]  %s1173, 4096, %s1171, %s1158, 256, 256, 16
        $region68: #{tpu_custom_call.1} parent=47 // pred_fallthru
          _
      $region48: #{tpu_custom_call.1} parent=5 // pred_fallthru
        _
      %p1179 = scmp.le.s32.totalorder 2, %s21
      // Predicated region
      $region69: #{tpu_custom_call.1} parent=5 // pred_check
        %p1180 = pneg %p1179
      $region70: #{tpu_custom_call.1} parent=5 // pred_check_branch
        %1182 = sbr.rel (%p1180) target = $region72
      $region71: #{tpu_custom_call.1} parent=5 // pred_region
        %s1183 = ssub.s32 %s21, 2
        // Predicated region
        $region73: #{tpu_custom_call.1} parent=71 // pred_check
          %p1184 = pneg %p202
        $region74: #{tpu_custom_call.1} parent=71 // pred_check_branch
          %1186 = sbr.rel (%p1184) target = $region76
        $region75: #{tpu_custom_call.1} parent=71 // pred_region
          %s1187 = sand.u32 %s187, 1
          %s1188 = scalar_lea.sflag [#allocation4], %s1187
          %s1189 = sand.u32 %s187, 1
          %s1190 = smul.addr %s1189, 256
          %s1191 = scalar_lea.vmem [#allocation10], %s1190
          %1192 = dma.done %s1188, 4096
        $region76: #{tpu_custom_call.1} parent=71 // pred_fallthru
          _
      $region72: #{tpu_custom_call.1} parent=5 // pred_fallthru
        _
    $region6: #{tpu_custom_call.1} parent=1 // loop_footer
      %s25 = sadd.s32 1, %s21
    $region7: #{tpu_custom_call.1} parent=1 // loop_footer_branch
      %20 = sbr.rel target = $region3
    $region8: #{tpu_custom_call.1} parent=1 // loop_exit
      _
    %1193 = vsyncpa [#allocation3], 1
    %s1194 = scalar_lea.sflag [#allocation3], 1
    %1195 = vsyncpa %s1194, 1
    %1196 = vsyncpa [#allocation6], 1
    %1197 = vsyncpa [#allocation9], 1
    %1198 = vsyncpa [#allocation4], 1
    %s1199 = scalar_lea.sflag [#allocation4], 1
    %1200 = vsyncpa %s1199, 1

</llo_original>
